<compile_context>
chip_gen: v6e
topology: v6e:2x2x1
jax: 0.10.0
libtpu: 0.0.40
codegen_flags: <defaults>
</compile_context>

<pallas_src>
import jax
import jax.numpy as jnp
import numpy as np
from jax import lax
from jax.experimental import pallas as pl
from jax.experimental.pallas import tpu as pltpu

# ----------------------------- model hyper-params (small) -----------------------------
B = 2             # batch
LEN_FEATURE = 32  # F : embedding dim == conv kernel width
LEN_WORDS = 50    # V : vocab size
LONGEST = 8       # sequence length AND number of conv output channels C (as in the module)
TYPENUM = 5       # number of classes

# (kernel_height, time_padding) for conv1..conv4, matching the PyTorch module
_BRANCHES = ((2, 1), (3, 1), (4, 2), (5, 2))
_MAXPAD = 2
_KH_MAX = 5
_L_OUT = tuple(LONGEST + 2 * p - kh + 1 for kh, p in _BRANCHES)        # (9, 8, 9, 8)
_L_OUT_PAD = 16                                                        # fused conv time axis
_NCH = 4 * LONGEST                                                     # 32 fused conv channels
_K_FOLD = ((_KH_MAX * LEN_WORDS + 127) // 128) * 128                   # 250 -> 256


# ----------------------------- Pallas kernel -----------------------------
def _cnn_kernel(tok_ref,   # (B, LONGEST)          int32  token ids (SMEM)
                w_ref,     # (K_FOLD + 4C, 4C)     bf16   [emb-folded conv | lane-padded FC]
                b_ref,     # (2, 4C)               f32    row0 = conv bias, row1 = FC bias
                out_ref):  # (B, TYPENUM)          f32    logits
    nb = tok_ref.shape[0]

    # ---- compile-time index planes for the shifted multi-hot -------------------------
    # column c encodes (tap j, vocab id v): c = j*V + v ; row t is the fused conv out-time.
    t_col = lax.broadcasted_iota(jnp.int32, (_L_OUT_PAD, _K_FOLD), 0)
    c_col = lax.broadcasted_iota(jnp.int32, (_L_OUT_PAD, _K_FOLD), 1)
    # j = c // V via threshold compares (cheaper / safer than vector integer division)
    j_col = sum((c_col >= m * LEN_WORDS).astype(jnp.int32) for m in range(1, _KH_MAX))
    v_col = c_col - j_col * LEN_WORDS
    s_need = t_col + j_col - _MAXPAD                     # which token position feeds (t, j)
    # token positions outside [0, LONGEST) never match below -> implicit zero time-padding;
    # pad columns c >= KH_MAX*V have v_col >= V so they never match a token id either.
    time_hit = [s_need == s for s in range(LONGEST)]

    # ---- shifted multi-hot, one (L_OUT_PAD, K_FOLD) block per batch element ----------
    blocks = []
    for b in range(nb):
        oh = jnp.zeros((_L_OUT_PAD, _K_FOLD), jnp.float32)
        for s in range(LONGEST):
            hit = time_hit[s] & (v_col == tok_ref[b, s])          # scalar SMEM read
            oh = jnp.where(hit, 1.0, oh)
        blocks.append(oh)
    onehot = jnp.concatenate(blocks, axis=0)                       # (B*L_OUT_PAD, K_FOLD)

    # ---- ONE matmul: embedding gather + all 4 conv branches + all taps ----------------
    acc = jnp.dot(onehot.astype(jnp.bfloat16), w_ref[:_K_FOLD, :],
                  preferred_element_type=jnp.float32)              # (B*L_OUT_PAD, 4C)

    # ---- bias + ReLU (f32), in-kernel validity mask, max-pool over time ---------------
    biases = b_ref[...]
    z = jnp.maximum(acc + biases[0:1, :], 0.0).reshape(nb, _L_OUT_PAD, _NCH)
    t_idx = lax.broadcasted_iota(jnp.int32, (nb, _L_OUT_PAD, _NCH), 1)
    ch_idx = lax.broadcasted_iota(jnp.int32, (nb, _L_OUT_PAD, _NCH), 2)
    lo = jnp.full_like(ch_idx, _L_OUT[0])
    for i in range(1, len(_BRANCHES)):
        lo = jnp.where(ch_idx >= i * LONGEST, _L_OUT[i], lo)
    # masking to 0 AFTER ReLU is safe: valid values are >= 0 so 0 never wins the max
    pooled = jnp.max(jnp.where(t_idx < lo, z, 0.0), axis=1)        # (B, 4C)

    # ---- final FC (FC weight block has zero-padded lanes beyond TYPENUM) ---------------
    res = jnp.dot(pooled.astype(jnp.bfloat16), w_ref[_K_FOLD:, :],
                  preferred_element_type=jnp.float32)              # (B, 4C)
    out_ref[...] = res[:, :TYPENUM] + biases[1:2, :TYPENUM]


# ----------------------------- wrapper -----------------------------
_COST = pl.CostEstimate(
    flops=2 * B * _L_OUT_PAD * _K_FOLD * _NCH + 2 * B * _NCH * _NCH,
    transcendentals=0,
    bytes_accessed=(4 * B * LONGEST                    # token ids
                    + 2 * (_K_FOLD + _NCH) * _NCH      # bf16 weight slab
                    + 4 * 2 * _NCH                     # f32 bias slab
                    + 4 * B * TYPENUM),                # logits
)


@jax.jit
def my_cnn_forward(tokens, packed):
    """tokens: (B, LONGEST) int32 token ids.  Returns (B, TYPENUM) float32 logits."""
    return pl.pallas_call(
        _cnn_kernel,
        out_shape=jax.ShapeDtypeStruct((tokens.shape[0], TYPENUM), jnp.float32),
        in_specs=[
            pl.BlockSpec(memory_space=pltpu.MemorySpace.SMEM),   # token ids (scalars)
            pl.BlockSpec(memory_space=pltpu.MemorySpace.VMEM),   # bf16 weight slab
            pl.BlockSpec(memory_space=pltpu.MemorySpace.VMEM),   # f32 bias slab
        ],
        out_specs=pl.BlockSpec(memory_space=pltpu.MemorySpace.VMEM),
        cost_estimate=_COST,
    )(tokens.astype(jnp.int32), packed["w_slab"], packed["b_slab"])


# ----------------------------- one-time weight packing -----------------------------
def pack_params(params):
    """Fold the embedding table into the stacked conv weights and pack all weights/biases
    into one bf16 slab + one f32 slab (3 DMAs total at kernel launch).

    Branch i's taps are placed at tap slots [MAXPAD - pad_i, MAXPAD - pad_i + kh_i) of the
    shared 5-tap window; folded[j*V + v, ch] = tbl[v] @ w_big[j*F:(j+1)*F, ch] computed in
    f32 and rounded to bf16 exactly once.  Done outside the jitted path with numpy.
    """
    c, f, v, nch = LONGEST, LEN_FEATURE, LEN_WORDS, _NCH
    w_big = np.zeros((_KH_MAX * f, nch), np.float32)
    b_big = np.zeros((nch,), np.float32)
    for i, (kh, pad) in enumerate(_BRANCHES):
        s = _MAXPAD - pad
        w = np.asarray(params[f"w{i + 1}"], np.float32)           # (kh, F, C)
        for k in range(kh):
            w_big[(s + k) * f:(s + k + 1) * f, i * c:(i + 1) * c] = w[k]
        b_big[i * c:(i + 1) * c] = np.asarray(params[f"b{i + 1}"], np.float32).reshape(-1)

    tbl = np.asarray(params["embedding"], np.float32)             # (V, F)
    folded = np.zeros((_K_FOLD, nch), np.float32)
    for j in range(_KH_MAX):
        folded[j * v:j * v + v, :] = tbl @ w_big[j * f:(j + 1) * f, :]

    wfc_pad = np.zeros((nch, nch), np.float32)
    wfc_pad[:, :TYPENUM] = np.asarray(params["wfc"], np.float32)
    w_slab = np.concatenate([folded, wfc_pad], axis=0)            # (K_FOLD + 4C, 4C)

    b_slab = np.zeros((2, nch), np.float32)
    b_slab[0] = b_big
    b_slab[1, :TYPENUM] = np.asarray(params["bfc"], np.float32).reshape(-1)

    return {"w_slab": jnp.asarray(w_slab, jnp.bfloat16),
            "b_slab": jnp.asarray(b_slab)}


# ----------------------------- deterministic params -----------------------------
def make_params(key):
    keys = jax.random.split(key, 12)
    c = LONGEST
    f = LEN_FEATURE
    emb_std = np.sqrt(2.0 / (LEN_WORDS + f))                      # xavier-normal-ish
    params = {"embedding": emb_std * jax.random.normal(keys[0], (LEN_WORDS, f), jnp.float32)}
    for i, (kh, _) in enumerate(_BRANCHES, start=1):
        std = np.sqrt(2.0 / (kh * f))
        # stored pre-transposed as (kh, F, C): w[k, f, c] == torch_conv_weight[c, 0, k, f]
        params[f"w{i}"] = std * jax.random.normal(keys[2 * i - 1], (kh, f, c), jnp.float32)
        params[f"b{i}"] = 0.01 * jax.random.normal(keys[2 * i], (1, c), jnp.float32)
    std_fc = np.sqrt(2.0 / (4 * c + TYPENUM))
    params["wfc"] = std_fc * jax.random.normal(keys[9], (4 * c, TYPENUM), jnp.float32)
    params["bfc"] = 0.01 * jax.random.normal(keys[10], (1, TYPENUM), jnp.float32)
    return params


# ----------------------------- pure-JAX f32 reference (sanity check) -----------------------------
def ref_forward(tokens, params):
    emb = jnp.take(params["embedding"], tokens, axis=0)           # (B, L, F)

    def branch(w, bias, kh, pad):
        e = jnp.pad(emb, ((0, 0), (pad, pad), (0, 0)))
        l_out = emb.shape[1] + 2 * pad - kh + 1
        acc = jnp.zeros((emb.shape[0], l_out, w.shape[2]), jnp.float32)
        for k in range(kh):
            acc = acc + jnp.einsum("btf,fc->btc", e[:, k:k + l_out, :], w[k])
        acc = jax.nn.relu(acc + bias[0][None, None, :])
        return jnp.max(acc, axis=1)

    pools = [branch(params[f"w{i}"], params[f"b{i}"], kh, pad)
             for i, (kh, pad) in enumerate(_BRANCHES, start=1)]
    pool = jnp.concatenate(pools, axis=1)
    return pool @ params["wfc"] + params["bfc"]


# ----------------------------- main -----------------------------
if __name__ == "__main__":
    key = jax.random.PRNGKey(0)
    k_tok, k_par = jax.random.split(key)
    tokens = jax.random.randint(k_tok, (B, LONGEST), 0, LEN_WORDS, dtype=jnp.int32)
    params = make_params(k_par)
    packed = pack_params(params)

    out = jax.block_until_ready(my_cnn_forward(tokens, packed))

    ref = ref_forward(tokens, params)
    # Kernel uses bf16 MXU operands (f32 accumulate, single bf16 round of the folded
    # table@weights product), so compare against the f32 reference at bf16-level tolerance.
    np.testing.assert_allclose(np.asarray(out), np.asarray(ref), rtol=3e-2, atol=3e-2)

    print("KERNEL_OK")
</pallas_src>

<mosaic_0001>
module attributes {stable_mosaic.version = 11 : i64} {
  func.func @_cnn_kernel(%arg0: memref<2x8xi32, #tpu.memory_space<smem>>, %arg1: memref<288x32xbf16, #tpu.memory_space<vmem>>, %arg2: memref<2x32xf32, #tpu.memory_space<vmem>>, %arg3: memref<2x5xf32, #tpu.memory_space<vmem>>) attributes {dimension_semantics = [], scalar_prefetch = 0 : i64, scratch_operands = 0 : i64, tpu.core_type = #tpu.core_type<tc>} {
    %0 = tpu.iota {dimensions = array<i32: 0>} : vector<16x256xi32>
    %1 = tpu.iota {dimensions = array<i32: 1>} : vector<16x256xi32>
    %c50_i32 = arith.constant 50 : i32
    %2 = vector.broadcast %c50_i32 : i32 to vector<16x256xi32>
    %3 = arith.cmpi sge, %1, %2 : vector<16x256xi32>
    %4 = arith.extui %3 : vector<16x256xi1> to vector<16x256xi32>
    %c0_i32 = arith.constant 0 : i32
    %5 = vector.broadcast %c0_i32 : i32 to vector<16x256xi32>
    %6 = arith.addi %5, %4 : vector<16x256xi32>
    %c100_i32 = arith.constant 100 : i32
    %7 = vector.broadcast %c100_i32 : i32 to vector<16x256xi32>
    %8 = arith.cmpi sge, %1, %7 : vector<16x256xi32>
    %9 = arith.extui %8 : vector<16x256xi1> to vector<16x256xi32>
    %10 = arith.addi %6, %9 : vector<16x256xi32>
    %c150_i32 = arith.constant 150 : i32
    %11 = vector.broadcast %c150_i32 : i32 to vector<16x256xi32>
    %12 = arith.cmpi sge, %1, %11 : vector<16x256xi32>
    %13 = arith.extui %12 : vector<16x256xi1> to vector<16x256xi32>
    %14 = arith.addi %10, %13 : vector<16x256xi32>
    %c200_i32 = arith.constant 200 : i32
    %15 = vector.broadcast %c200_i32 : i32 to vector<16x256xi32>
    %16 = arith.cmpi sge, %1, %15 : vector<16x256xi32>
    %17 = arith.extui %16 : vector<16x256xi1> to vector<16x256xi32>
    %18 = arith.addi %14, %17 : vector<16x256xi32>
    %c50_i32_0 = arith.constant 50 : i32
    %19 = vector.broadcast %c50_i32_0 : i32 to vector<16x256xi32>
    %20 = arith.muli %18, %19 : vector<16x256xi32>
    %21 = arith.subi %1, %20 : vector<16x256xi32>
    %22 = arith.addi %0, %18 : vector<16x256xi32>
    %c2_i32 = arith.constant 2 : i32
    %23 = vector.broadcast %c2_i32 : i32 to vector<16x256xi32>
    %24 = arith.subi %22, %23 : vector<16x256xi32>
    %c0_i32_1 = arith.constant 0 : i32
    %25 = vector.broadcast %c0_i32_1 : i32 to vector<16x256xi32>
    %26 = arith.cmpi eq, %24, %25 : vector<16x256xi32>
    %c1_i32 = arith.constant 1 : i32
    %27 = vector.broadcast %c1_i32 : i32 to vector<16x256xi32>
    %28 = arith.cmpi eq, %24, %27 : vector<16x256xi32>
    %c2_i32_2 = arith.constant 2 : i32
    %29 = vector.broadcast %c2_i32_2 : i32 to vector<16x256xi32>
    %30 = arith.cmpi eq, %24, %29 : vector<16x256xi32>
    %c3_i32 = arith.constant 3 : i32
    %31 = vector.broadcast %c3_i32 : i32 to vector<16x256xi32>
    %32 = arith.cmpi eq, %24, %31 : vector<16x256xi32>
    %c4_i32 = arith.constant 4 : i32
    %33 = vector.broadcast %c4_i32 : i32 to vector<16x256xi32>
    %34 = arith.cmpi eq, %24, %33 : vector<16x256xi32>
    %c5_i32 = arith.constant 5 : i32
    %35 = vector.broadcast %c5_i32 : i32 to vector<16x256xi32>
    %36 = arith.cmpi eq, %24, %35 : vector<16x256xi32>
    %c6_i32 = arith.constant 6 : i32
    %37 = vector.broadcast %c6_i32 : i32 to vector<16x256xi32>
    %38 = arith.cmpi eq, %24, %37 : vector<16x256xi32>
    %c7_i32 = arith.constant 7 : i32
    %39 = vector.broadcast %c7_i32 : i32 to vector<16x256xi32>
    %40 = arith.cmpi eq, %24, %39 : vector<16x256xi32>
    %cst = arith.constant 0.000000e+00 : f32
    %41 = vector.broadcast %cst : f32 to vector<16x256xf32>
    %c0 = arith.constant 0 : index
    %c0_3 = arith.constant 0 : index
    %42 = memref.load %arg0[%c0, %c0_3] : memref<2x8xi32, #tpu.memory_space<smem>>
    %43 = vector.broadcast %42 : i32 to vector<16x256xi32>
    %44 = arith.cmpi eq, %21, %43 : vector<16x256xi32>
    %45 = arith.andi %26, %44 : vector<16x256xi1>
    %cst_4 = arith.constant 1.000000e+00 : f32
    %46 = vector.broadcast %cst_4 : f32 to vector<16x256xf32>
    %47 = arith.select %45, %46, %41 : vector<16x256xi1>, vector<16x256xf32>
    %c0_5 = arith.constant 0 : index
    %c1 = arith.constant 1 : index
    %48 = memref.load %arg0[%c0_5, %c1] : memref<2x8xi32, #tpu.memory_space<smem>>
    %49 = vector.broadcast %48 : i32 to vector<16x256xi32>
    %50 = arith.cmpi eq, %21, %49 : vector<16x256xi32>
    %51 = arith.andi %28, %50 : vector<16x256xi1>
    %cst_6 = arith.constant 1.000000e+00 : f32
    %52 = vector.broadcast %cst_6 : f32 to vector<16x256xf32>
    %53 = arith.select %51, %52, %47 : vector<16x256xi1>, vector<16x256xf32>
    %c0_7 = arith.constant 0 : index
    %c2 = arith.constant 2 : index
    %54 = memref.load %arg0[%c0_7, %c2] : memref<2x8xi32, #tpu.memory_space<smem>>
    %55 = vector.broadcast %54 : i32 to vector<16x256xi32>
    %56 = arith.cmpi eq, %21, %55 : vector<16x256xi32>
    %57 = arith.andi %30, %56 : vector<16x256xi1>
    %cst_8 = arith.constant 1.000000e+00 : f32
    %58 = vector.broadcast %cst_8 : f32 to vector<16x256xf32>
    %59 = arith.select %57, %58, %53 : vector<16x256xi1>, vector<16x256xf32>
    %c0_9 = arith.constant 0 : index
    %c3 = arith.constant 3 : index
    %60 = memref.load %arg0[%c0_9, %c3] : memref<2x8xi32, #tpu.memory_space<smem>>
    %61 = vector.broadcast %60 : i32 to vector<16x256xi32>
    %62 = arith.cmpi eq, %21, %61 : vector<16x256xi32>
    %63 = arith.andi %32, %62 : vector<16x256xi1>
    %cst_10 = arith.constant 1.000000e+00 : f32
    %64 = vector.broadcast %cst_10 : f32 to vector<16x256xf32>
    %65 = arith.select %63, %64, %59 : vector<16x256xi1>, vector<16x256xf32>
    %c0_11 = arith.constant 0 : index
    %c4 = arith.constant 4 : index
    %66 = memref.load %arg0[%c0_11, %c4] : memref<2x8xi32, #tpu.memory_space<smem>>
    %67 = vector.broadcast %66 : i32 to vector<16x256xi32>
    %68 = arith.cmpi eq, %21, %67 : vector<16x256xi32>
    %69 = arith.andi %34, %68 : vector<16x256xi1>
    %cst_12 = arith.constant 1.000000e+00 : f32
    %70 = vector.broadcast %cst_12 : f32 to vector<16x256xf32>
    %71 = arith.select %69, %70, %65 : vector<16x256xi1>, vector<16x256xf32>
    %c0_13 = arith.constant 0 : index
    %c5 = arith.constant 5 : index
    %72 = memref.load %arg0[%c0_13, %c5] : memref<2x8xi32, #tpu.memory_space<smem>>
    %73 = vector.broadcast %72 : i32 to vector<16x256xi32>
    %74 = arith.cmpi eq, %21, %73 : vector<16x256xi32>
    %75 = arith.andi %36, %74 : vector<16x256xi1>
    %cst_14 = arith.constant 1.000000e+00 : f32
    %76 = vector.broadcast %cst_14 : f32 to vector<16x256xf32>
    %77 = arith.select %75, %76, %71 : vector<16x256xi1>, vector<16x256xf32>
    %c0_15 = arith.constant 0 : index
    %c6 = arith.constant 6 : index
    %78 = memref.load %arg0[%c0_15, %c6] : memref<2x8xi32, #tpu.memory_space<smem>>
    %79 = vector.broadcast %78 : i32 to vector<16x256xi32>
    %80 = arith.cmpi eq, %21, %79 : vector<16x256xi32>
    %81 = arith.andi %38, %80 : vector<16x256xi1>
    %cst_16 = arith.constant 1.000000e+00 : f32
    %82 = vector.broadcast %cst_16 : f32 to vector<16x256xf32>
    %83 = arith.select %81, %82, %77 : vector<16x256xi1>, vector<16x256xf32>
    %c0_17 = arith.constant 0 : index
    %c7 = arith.constant 7 : index
    %84 = memref.load %arg0[%c0_17, %c7] : memref<2x8xi32, #tpu.memory_space<smem>>
    %85 = vector.broadcast %84 : i32 to vector<16x256xi32>
    %86 = arith.cmpi eq, %21, %85 : vector<16x256xi32>
    %87 = arith.andi %40, %86 : vector<16x256xi1>
    %cst_18 = arith.constant 1.000000e+00 : f32
    %88 = vector.broadcast %cst_18 : f32 to vector<16x256xf32>
    %89 = arith.select %87, %88, %83 : vector<16x256xi1>, vector<16x256xf32>
    %cst_19 = arith.constant 0.000000e+00 : f32
    %90 = vector.broadcast %cst_19 : f32 to vector<16x256xf32>
    %c1_20 = arith.constant 1 : index
    %c0_21 = arith.constant 0 : index
    %91 = memref.load %arg0[%c1_20, %c0_21] : memref<2x8xi32, #tpu.memory_space<smem>>
    %92 = vector.broadcast %91 : i32 to vector<16x256xi32>
    %93 = arith.cmpi eq, %21, %92 : vector<16x256xi32>
    %94 = arith.andi %26, %93 : vector<16x256xi1>
    %cst_22 = arith.constant 1.000000e+00 : f32
    %95 = vector.broadcast %cst_22 : f32 to vector<16x256xf32>
    %96 = arith.select %94, %95, %90 : vector<16x256xi1>, vector<16x256xf32>
    %c1_23 = arith.constant 1 : index
    %c1_24 = arith.constant 1 : index
    %97 = memref.load %arg0[%c1_23, %c1_24] : memref<2x8xi32, #tpu.memory_space<smem>>
    %98 = vector.broadcast %97 : i32 to vector<16x256xi32>
    %99 = arith.cmpi eq, %21, %98 : vector<16x256xi32>
    %100 = arith.andi %28, %99 : vector<16x256xi1>
    %cst_25 = arith.constant 1.000000e+00 : f32
    %101 = vector.broadcast %cst_25 : f32 to vector<16x256xf32>
    %102 = arith.select %100, %101, %96 : vector<16x256xi1>, vector<16x256xf32>
    %c1_26 = arith.constant 1 : index
    %c2_27 = arith.constant 2 : index
    %103 = memref.load %arg0[%c1_26, %c2_27] : memref<2x8xi32, #tpu.memory_space<smem>>
    %104 = vector.broadcast %103 : i32 to vector<16x256xi32>
    %105 = arith.cmpi eq, %21, %104 : vector<16x256xi32>
    %106 = arith.andi %30, %105 : vector<16x256xi1>
    %cst_28 = arith.constant 1.000000e+00 : f32
    %107 = vector.broadcast %cst_28 : f32 to vector<16x256xf32>
    %108 = arith.select %106, %107, %102 : vector<16x256xi1>, vector<16x256xf32>
    %c1_29 = arith.constant 1 : index
    %c3_30 = arith.constant 3 : index
    %109 = memref.load %arg0[%c1_29, %c3_30] : memref<2x8xi32, #tpu.memory_space<smem>>
    %110 = vector.broadcast %109 : i32 to vector<16x256xi32>
    %111 = arith.cmpi eq, %21, %110 : vector<16x256xi32>
    %112 = arith.andi %32, %111 : vector<16x256xi1>
    %cst_31 = arith.constant 1.000000e+00 : f32
    %113 = vector.broadcast %cst_31 : f32 to vector<16x256xf32>
    %114 = arith.select %112, %113, %108 : vector<16x256xi1>, vector<16x256xf32>
    %c1_32 = arith.constant 1 : index
    %c4_33 = arith.constant 4 : index
    %115 = memref.load %arg0[%c1_32, %c4_33] : memref<2x8xi32, #tpu.memory_space<smem>>
    %116 = vector.broadcast %115 : i32 to vector<16x256xi32>
    %117 = arith.cmpi eq, %21, %116 : vector<16x256xi32>
    %118 = arith.andi %34, %117 : vector<16x256xi1>
    %cst_34 = arith.constant 1.000000e+00 : f32
    %119 = vector.broadcast %cst_34 : f32 to vector<16x256xf32>
    %120 = arith.select %118, %119, %114 : vector<16x256xi1>, vector<16x256xf32>
    %c1_35 = arith.constant 1 : index
    %c5_36 = arith.constant 5 : index
    %121 = memref.load %arg0[%c1_35, %c5_36] : memref<2x8xi32, #tpu.memory_space<smem>>
    %122 = vector.broadcast %121 : i32 to vector<16x256xi32>
    %123 = arith.cmpi eq, %21, %122 : vector<16x256xi32>
    %124 = arith.andi %36, %123 : vector<16x256xi1>
    %cst_37 = arith.constant 1.000000e+00 : f32
    %125 = vector.broadcast %cst_37 : f32 to vector<16x256xf32>
    %126 = arith.select %124, %125, %120 : vector<16x256xi1>, vector<16x256xf32>
    %c1_38 = arith.constant 1 : index
    %c6_39 = arith.constant 6 : index
    %127 = memref.load %arg0[%c1_38, %c6_39] : memref<2x8xi32, #tpu.memory_space<smem>>
    %128 = vector.broadcast %127 : i32 to vector<16x256xi32>
    %129 = arith.cmpi eq, %21, %128 : vector<16x256xi32>
    %130 = arith.andi %38, %129 : vector<16x256xi1>
    %cst_40 = arith.constant 1.000000e+00 : f32
    %131 = vector.broadcast %cst_40 : f32 to vector<16x256xf32>
    %132 = arith.select %130, %131, %126 : vector<16x256xi1>, vector<16x256xf32>
    %c1_41 = arith.constant 1 : index
    %c7_42 = arith.constant 7 : index
    %133 = memref.load %arg0[%c1_41, %c7_42] : memref<2x8xi32, #tpu.memory_space<smem>>
    %134 = vector.broadcast %133 : i32 to vector<16x256xi32>
    %135 = arith.cmpi eq, %21, %134 : vector<16x256xi32>
    %136 = arith.andi %40, %135 : vector<16x256xi1>
    %cst_43 = arith.constant 1.000000e+00 : f32
    %137 = vector.broadcast %cst_43 : f32 to vector<16x256xf32>
    %138 = arith.select %136, %137, %132 : vector<16x256xi1>, vector<16x256xf32>
    %139 = tpu.concatenate %89, %138 in 0 : vector<16x256xf32>, vector<16x256xf32> -> vector<32x256xf32>
    %140 = arith.truncf %139 : vector<32x256xf32> to vector<32x256xbf16>
    %c0_44 = arith.constant 0 : index
    %c0_45 = arith.constant 0 : index
    %141 = vector.load %arg1[%c0_44, %c0_45] : memref<288x32xbf16, #tpu.memory_space<vmem>>, vector<256x32xbf16>
    %cst_46 = arith.constant dense<0.000000e+00> : vector<32x32xf32>
    %142 = tpu.matmul %140, %141, %cst_46 {dimension_numbers = #tpu.dot_dimension_numbers<[1], [0], [0], [1], [0, 0, 1, 1], [], []>} : vector<32x256xbf16>, vector<256x32xbf16>, vector<32x32xf32> -> vector<32x32xf32>
    %c0_47 = arith.constant 0 : index
    %c0_48 = arith.constant 0 : index
    %143 = vector.load %arg2[%c0_47, %c0_48] : memref<2x32xf32, #tpu.memory_space<vmem>>, vector<2x32xf32>
    %144 = vector.extract_strided_slice %143 {offsets = [0, 0], sizes = [1, 32], strides = [1, 1]} : vector<2x32xf32> to vector<1x32xf32>
    %145 = vector.broadcast %144 : vector<1x32xf32> to vector<32x32xf32>
    %146 = arith.addf %142, %145 : vector<32x32xf32>
    %cst_49 = arith.constant 0.000000e+00 : f32
    %147 = vector.broadcast %cst_49 : f32 to vector<32x32xf32>
    %148 = arith.maximumf %146, %147 : vector<32x32xf32>
    %149 = vector.shape_cast %148 : vector<32x32xf32> to vector<2x16x32xf32>
    %150 = tpu.iota {dimensions = array<i32: 1>} : vector<2x16x32xi32>
    %151 = tpu.iota {dimensions = array<i32: 2>} : vector<2x16x32xi32>
    %c9_i32 = arith.constant 9 : i32
    %152 = vector.broadcast %c9_i32 : i32 to vector<2x16x32xi32>
    %c8_i32 = arith.constant 8 : i32
    %153 = vector.broadcast %c8_i32 : i32 to vector<2x16x32xi32>
    %154 = arith.cmpi sge, %151, %153 : vector<2x16x32xi32>
    %c8_i32_50 = arith.constant 8 : i32
    %155 = vector.broadcast %c8_i32_50 : i32 to vector<2x16x32xi32>
    %156 = arith.select %154, %155, %152 : vector<2x16x32xi1>, vector<2x16x32xi32>
    %c16_i32 = arith.constant 16 : i32
    %157 = vector.broadcast %c16_i32 : i32 to vector<2x16x32xi32>
    %158 = arith.cmpi sge, %151, %157 : vector<2x16x32xi32>
    %c9_i32_51 = arith.constant 9 : i32
    %159 = vector.broadcast %c9_i32_51 : i32 to vector<2x16x32xi32>
    %160 = arith.select %158, %159, %156 : vector<2x16x32xi1>, vector<2x16x32xi32>
    %c24_i32 = arith.constant 24 : i32
    %161 = vector.broadcast %c24_i32 : i32 to vector<2x16x32xi32>
    %162 = arith.cmpi sge, %151, %161 : vector<2x16x32xi32>
    %c8_i32_52 = arith.constant 8 : i32
    %163 = vector.broadcast %c8_i32_52 : i32 to vector<2x16x32xi32>
    %164 = arith.select %162, %163, %160 : vector<2x16x32xi1>, vector<2x16x32xi32>
    %165 = arith.cmpi slt, %150, %164 : vector<2x16x32xi32>
    %cst_53 = arith.constant 0.000000e+00 : f32
    %166 = vector.broadcast %cst_53 : f32 to vector<2x16x32xf32>
    %167 = arith.select %165, %149, %166 : vector<2x16x32xi1>, vector<2x16x32xf32>
    %cst_54 = arith.constant dense<0xFF800000> : vector<2x32xf32>
    %168 = vector.multi_reduction <maximumf>, %167, %cst_54 [1] : vector<2x16x32xf32> to vector<2x32xf32>
    %169 = arith.truncf %168 : vector<2x32xf32> to vector<2x32xbf16>
    %c256 = arith.constant 256 : index
    %c0_55 = arith.constant 0 : index
    %170 = vector.load %arg1[%c256, %c0_55] : memref<288x32xbf16, #tpu.memory_space<vmem>>, vector<32x32xbf16>
    %cst_56 = arith.constant dense<0.000000e+00> : vector<2x32xf32>
    %171 = tpu.matmul %169, %170, %cst_56 {dimension_numbers = #tpu.dot_dimension_numbers<[1], [0], [0], [1], [0, 0, 1, 1], [], []>} : vector<2x32xbf16>, vector<32x32xbf16>, vector<2x32xf32> -> vector<2x32xf32>
    %172 = vector.extract_strided_slice %171 {offsets = [0, 0], sizes = [2, 5], strides = [1, 1]} : vector<2x32xf32> to vector<2x5xf32>
    %173 = vector.extract_strided_slice %143 {offsets = [1, 0], sizes = [1, 5], strides = [1, 1]} : vector<2x32xf32> to vector<1x5xf32>
    %174 = vector.broadcast %173 : vector<1x5xf32> to vector<2x5xf32>
    %175 = arith.addf %172, %174 : vector<2x5xf32>
    %c0_57 = arith.constant 0 : index
    %c0_58 = arith.constant 0 : index
    %176 = vector.load %arg3[%c0_57, %c0_58] : memref<2x5xf32, #tpu.memory_space<vmem>>, vector<2x5xf32>
    tpu.vector_store %arg3[%c0_57, %c0_58], %175 {strides = array<i32>} : memref<2x5xf32, #tpu.memory_space<vmem>>, vector<2x5xf32>,
    return
  }
}

</mosaic_0001>

<llo_original>
// kernel: my_cnn_forward.1
$region0: #{my_cnn_forward.1}
  #allocation0 [shape = 'u32[]', space=smem, size = 0x4, offset = 0x4, fixed_abs, tag = 'smem constant byte address 0x4 - core index']
  #allocation1 [shape = 'u32[144,128]{1,0:T(1,128)}', space=vmem, size = 0x12000, scoped, tag = 'internal scratch']
  %s0 = inlined_call_operand.vmem [shape: s32[2,8], index: 0, kind: input, shape index: {}]
  %s1 = inlined_call_operand.vmem [shape: bf16[288,32], index: 1, kind: input, shape index: {}]
  %s2 = inlined_call_operand.vmem [shape: f32[2,32], index: 2, kind: input, shape index: {}]
  %s3 = inlined_call_operand.hbm [shape: f32[2,5], index: 3, kind: output, shape index: {}]
  %s4 = sld [smem:[#allocation0]]
  $region26: #{my_cnn_forward.1} parent=0
    _
  %s6 = ssub.s32 1, %s4
  %s7 = scalar_select 0, %s6, %s4
  $region1: #{my_cnn_forward.1} parent=0
    #allocation2 [shape = 'u8[1024]{0}', space=smem, size = 0x400, scoped, tag = 'input window, operand 0, single buffered']
    #allocation3 [shape = 's32[1]{0}', space=sflag, size = 0x4, scoped, tag = 'scoped memory for my_cnn_forward.1']
    #allocation4 [shape = 's32[1]{0}', space=sflag, size = 0x4, scoped, tag = 'scoped memory for my_cnn_forward.1']
    #allocation5 [shape = 'u8[1024]{0}', space=vmem, size = 0x400, scoped, tag = 'output window, operand 0, single buffered']
    %8 = vsyncpa [#allocation4], 0
    %9 = vsyncpa [#allocation3], 0
    // Predicated region
    $region2: #{my_cnn_forward.1} parent=1 // pred_check
      _
    $region3: #{my_cnn_forward.1} parent=1 // pred_check_branch
      %11 = sbr.rel (0) target = $region5
    $region4: #{my_cnn_forward.1} parent=1 // pred_region
      %s13 = ssub.s32 32, 32
      %14 = vsyncadd [#allocation4], %s13
      %s16 = sshll.u32 %s0, 4
      %s17 = int_to_ptr.vmem [resolvable:$true] %s16
      %19 = dma.vmem_to_smem %s17, 32, [#allocation2], [#allocation4]
    $region5: #{my_cnn_forward.1} parent=1 // pred_fallthru
      _
    // Predicated region
    $region6: #{my_cnn_forward.1} parent=1 // pred_check
      _
    $region7: #{my_cnn_forward.1} parent=1 // pred_check_branch
      %21 = sbr.rel (0) target = $region9
    $region8: #{my_cnn_forward.1} parent=1 // pred_region
      _
    $region9: #{my_cnn_forward.1} parent=1 // pred_fallthru
      _
    // Predicated region
    $region10: #{my_cnn_forward.1} parent=1 // pred_check
      _
    $region11: #{my_cnn_forward.1} parent=1 // pred_check_branch
      %23 = sbr.rel (0) target = $region13
    $region12: #{my_cnn_forward.1} parent=1 // pred_region
      _
    $region13: #{my_cnn_forward.1} parent=1 // pred_fallthru
      _
    // Predicated region
    $region14: #{my_cnn_forward.1} parent=1 // pred_check
      _
    $region15: #{my_cnn_forward.1} parent=1 // pred_check_branch
      %25 = sbr.rel (0) target = $region17
    $region16: #{my_cnn_forward.1} parent=1 // pred_region
      %26 = dma.done [#allocation4], 32
    $region17: #{my_cnn_forward.1} parent=1 // pred_fallthru
      _
    %27 = sfence
    %v29 = vlaneseq
    %v30 = vshrl.u32 %v29, 7
    %v31 = vadd.s32 %v30, 8
    %v32 = vlaneseq
    %v33 = vand.u32 %v32, 127
    %v34 = vadd.s32 %v33, 128
    %vm35 = vcmp.ge.s32.totalorder %v33, 50
    %vm36 = vcmp.ge.s32.totalorder %v34, 50
    %v37 = vsel %vm35, 1, 0
    %v38 = vsel %vm36, 1, 0
    %vm39 = vcmp.ge.s32.totalorder %v33, 100
    %vm40 = vcmp.ge.s32.totalorder %v34, 100
    %v41 = vsel %vm39, 1, 0
    %v42 = vsel %vm40, 1, 0
    %v43 = vadd.s32 %v37, %v41
    %v44 = vadd.s32 %v38, %v42
    %vm45 = vcmp.ge.s32.totalorder %v33, 150
    %vm46 = vcmp.ge.s32.totalorder %v34, 150
    %v47 = vsel %vm45, 1, 0
    %v48 = vsel %vm46, 1, 0
    %v49 = vadd.s32 %v43, %v47
    %v50 = vadd.s32 %v44, %v48
    %vm51 = vcmp.ge.s32.totalorder %v33, 200
    %vm52 = vcmp.ge.s32.totalorder %v34, 200
    %v53 = vsel %vm51, 1, 0
    %v54 = vsel %vm52, 1, 0
    %v55 = vadd.s32 %v49, %v53
    %v56 = vadd.s32 %v50, %v54
    %v57 = vmul.u32 %v55, 50
    %v58 = vmul.u32 %v56, 50
    %v59 = vsub.s32 %v33, %v57
    %v60 = vsub.s32 %v34, %v58
    %v61 = vadd.s32 %v30, %v55
    %v62 = vadd.s32 %v30, %v56
    %v63 = vadd.s32 %v31, %v55
    %v64 = vadd.s32 %v31, %v56
    %v65 = vsub.s32 %v61, 2
    %v66 = vsub.s32 %v62, 2
    %v67 = vsub.s32 %v63, 2
    %v68 = vsub.s32 %v64, 2
    %vm69 = vcmp.eq.s32.totalorder %v65, 0
    %vm70 = vcmp.eq.s32.totalorder %v66, 0
    %vm71 = vcmp.eq.s32.totalorder %v67, 0
    %vm72 = vcmp.eq.s32.totalorder %v68, 0
    %vm73 = vcmp.eq.s32.totalorder %v65, 1
    %vm74 = vcmp.eq.s32.totalorder %v66, 1
    %vm75 = vcmp.eq.s32.totalorder %v67, 1
    %vm76 = vcmp.eq.s32.totalorder %v68, 1
    %vm77 = vcmp.eq.s32.totalorder %v65, 2
    %vm78 = vcmp.eq.s32.totalorder %v66, 2
    %vm79 = vcmp.eq.s32.totalorder %v67, 2
    %vm80 = vcmp.eq.s32.totalorder %v68, 2
    %vm81 = vcmp.eq.s32.totalorder %v65, 3
    %vm82 = vcmp.eq.s32.totalorder %v66, 3
    %vm83 = vcmp.eq.s32.totalorder %v67, 3
    %vm84 = vcmp.eq.s32.totalorder %v68, 3
    %vm85 = vcmp.eq.s32.totalorder %v65, 4
    %vm86 = vcmp.eq.s32.totalorder %v66, 4
    %vm87 = vcmp.eq.s32.totalorder %v67, 4
    %vm88 = vcmp.eq.s32.totalorder %v68, 4
    %vm89 = vcmp.eq.s32.totalorder %v65, 5
    %vm90 = vcmp.eq.s32.totalorder %v66, 5
    %vm91 = vcmp.eq.s32.totalorder %v67, 5
    %vm92 = vcmp.eq.s32.totalorder %v68, 5
    %vm93 = vcmp.eq.s32.totalorder %v65, 6
    %vm94 = vcmp.eq.s32.totalorder %v66, 6
    %vm95 = vcmp.eq.s32.totalorder %v67, 6
    %vm96 = vcmp.eq.s32.totalorder %v68, 6
    %vm97 = vcmp.eq.s32.totalorder %v65, 7
    %vm98 = vcmp.eq.s32.totalorder %v66, 7
    %vm99 = vcmp.eq.s32.totalorder %v67, 7
    %vm100 = vcmp.eq.s32.totalorder %v68, 7
    %s101 = sld [smem:[#allocation2]]
    %v102 = vstv %s101
    %vm103 = vcmp.eq.s32.totalorder %v59, %v102
    %vm104 = vcmp.eq.s32.totalorder %v60, %v102
    %vm105 = vmand %vm69, %vm103
    %vm106 = vmand %vm70, %vm104
    %vm107 = vmand %vm71, %vm103
    %vm108 = vmand %vm72, %vm104
    %v109 = vsel %vm105, 1.0, 0.0
    %v110 = vsel %vm106, 1.0, 0.0
    %v111 = vsel %vm107, 1.0, 0.0
    %v112 = vsel %vm108, 1.0, 0.0
    %s113 = sld [smem:[#allocation2 + $0x1]]
    %v114 = vstv %s113
    %vm115 = vcmp.eq.s32.totalorder %v59, %v114
    %vm116 = vcmp.eq.s32.totalorder %v60, %v114
    %vm117 = vmand %vm73, %vm115
    %vm118 = vmand %vm74, %vm116
    %vm119 = vmand %vm75, %vm115
    %vm120 = vmand %vm76, %vm116
    %v121 = vsel %vm117, 1.0, %v109
    %v122 = vsel %vm118, 1.0, %v110
    %v123 = vsel %vm119, 1.0, %v111
    %v124 = vsel %vm120, 1.0, %v112
    %s125 = sld [smem:[#allocation2 + $0x2]]
    %v126 = vstv %s125
    %vm127 = vcmp.eq.s32.totalorder %v59, %v126
    %vm128 = vcmp.eq.s32.totalorder %v60, %v126
    %vm129 = vmand %vm77, %vm127
    %vm130 = vmand %vm78, %vm128
    %vm131 = vmand %vm79, %vm127
    %vm132 = vmand %vm80, %vm128
    %v133 = vsel %vm129, 1.0, %v121
    %v134 = vsel %vm130, 1.0, %v122
    %v135 = vsel %vm131, 1.0, %v123
    %v136 = vsel %vm132, 1.0, %v124
    %s137 = sld [smem:[#allocation2 + $0x3]]
    %v138 = vstv %s137
    %vm139 = vcmp.eq.s32.totalorder %v59, %v138
    %vm140 = vcmp.eq.s32.totalorder %v60, %v138
    %vm141 = vmand %vm81, %vm139
    %vm142 = vmand %vm82, %vm140
    %vm143 = vmand %vm83, %vm139
    %vm144 = vmand %vm84, %vm140
    %v145 = vsel %vm141, 1.0, %v133
    %v146 = vsel %vm142, 1.0, %v134
    %v147 = vsel %vm143, 1.0, %v135
    %v148 = vsel %vm144, 1.0, %v136
    %s149 = sld [smem:[#allocation2 + $0x4]]
    %v150 = vstv %s149
    %vm151 = vcmp.eq.s32.totalorder %v59, %v150
    %vm152 = vcmp.eq.s32.totalorder %v60, %v150
    %vm153 = vmand %vm85, %vm151
    %vm154 = vmand %vm86, %vm152
    %vm155 = vmand %vm87, %vm151
    %vm156 = vmand %vm88, %vm152
    %v157 = vsel %vm153, 1.0, %v145
    %v158 = vsel %vm154, 1.0, %v146
    %v159 = vsel %vm155, 1.0, %v147
    %v160 = vsel %vm156, 1.0, %v148
    %s161 = sld [smem:[#allocation2 + $0x5]]
    %v162 = vstv %s161
    %vm163 = vcmp.eq.s32.totalorder %v59, %v162
    %vm164 = vcmp.eq.s32.totalorder %v60, %v162
    %vm165 = vmand %vm89, %vm163
    %vm166 = vmand %vm90, %vm164
    %vm167 = vmand %vm91, %vm163
    %vm168 = vmand %vm92, %vm164
    %v169 = vsel %vm165, 1.0, %v157
    %v170 = vsel %vm166, 1.0, %v158
    %v171 = vsel %vm167, 1.0, %v159
    %v172 = vsel %vm168, 1.0, %v160
    %s173 = sld [smem:[#allocation2 + $0x6]]
    %v174 = vstv %s173
    %vm175 = vcmp.eq.s32.totalorder %v59, %v174
    %vm176 = vcmp.eq.s32.totalorder %v60, %v174
    %vm177 = vmand %vm93, %vm175
    %vm178 = vmand %vm94, %vm176
    %vm179 = vmand %vm95, %vm175
    %vm180 = vmand %vm96, %vm176
    %v181 = vsel %vm177, 1.0, %v169
    %v182 = vsel %vm178, 1.0, %v170
    %v183 = vsel %vm179, 1.0, %v171
    %v184 = vsel %vm180, 1.0, %v172
    %s185 = sld [smem:[#allocation2 + $0x7]]
    %v186 = vstv %s185
    %vm187 = vcmp.eq.s32.totalorder %v59, %v186
    %vm188 = vcmp.eq.s32.totalorder %v60, %v186
    %vm189 = vmand %vm97, %vm187
    %vm190 = vmand %vm98, %vm188
    %vm191 = vmand %vm99, %vm187
    %vm192 = vmand %vm100, %vm188
    %v193 = vsel %vm189, 1.0, %v181
    %v194 = vsel %vm190, 1.0, %v182
    %v195 = vsel %vm191, 1.0, %v183
    %v196 = vsel %vm192, 1.0, %v184
    %s197 = sld [smem:[#allocation2 + $0x80]]
    %v198 = vstv %s197
    %vm199 = vcmp.eq.s32.totalorder %v59, %v198
    %vm200 = vcmp.eq.s32.totalorder %v60, %v198
    %vm201 = vmand %vm69, %vm199
    %vm202 = vmand %vm70, %vm200
    %vm203 = vmand %vm71, %vm199
    %vm204 = vmand %vm72, %vm200
    %v205 = vsel %vm201, 1.0, 0.0
    %v206 = vsel %vm202, 1.0, 0.0
    %v207 = vsel %vm203, 1.0, 0.0
    %v208 = vsel %vm204, 1.0, 0.0
    %s209 = sld [smem:[#allocation2 + $0x81]]
    %v210 = vstv %s209
    %vm211 = vcmp.eq.s32.totalorder %v59, %v210
    %vm212 = vcmp.eq.s32.totalorder %v60, %v210
    %vm213 = vmand %vm73, %vm211
    %vm214 = vmand %vm74, %vm212
    %vm215 = vmand %vm75, %vm211
    %vm216 = vmand %vm76, %vm212
    %v217 = vsel %vm213, 1.0, %v205
    %v218 = vsel %vm214, 1.0, %v206
    %v219 = vsel %vm215, 1.0, %v207
    %v220 = vsel %vm216, 1.0, %v208
    %s221 = sld [smem:[#allocation2 + $0x82]]
    %v222 = vstv %s221
    %vm223 = vcmp.eq.s32.totalorder %v59, %v222
    %vm224 = vcmp.eq.s32.totalorder %v60, %v222
    %vm225 = vmand %vm77, %vm223
    %vm226 = vmand %vm78, %vm224
    %vm227 = vmand %vm79, %vm223
    %vm228 = vmand %vm80, %vm224
    %v229 = vsel %vm225, 1.0, %v217
    %v230 = vsel %vm226, 1.0, %v218
    %v231 = vsel %vm227, 1.0, %v219
    %v232 = vsel %vm228, 1.0, %v220
    %s233 = sld [smem:[#allocation2 + $0x83]]
    %v234 = vstv %s233
    %vm235 = vcmp.eq.s32.totalorder %v59, %v234
    %vm236 = vcmp.eq.s32.totalorder %v60, %v234
    %vm237 = vmand %vm81, %vm235
    %vm238 = vmand %vm82, %vm236
    %vm239 = vmand %vm83, %vm235
    %vm240 = vmand %vm84, %vm236
    %v241 = vsel %vm237, 1.0, %v229
    %v242 = vsel %vm238, 1.0, %v230
    %v243 = vsel %vm239, 1.0, %v231
    %v244 = vsel %vm240, 1.0, %v232
    %s245 = sld [smem:[#allocation2 + $0x84]]
    %v246 = vstv %s245
    %vm247 = vcmp.eq.s32.totalorder %v59, %v246
    %vm248 = vcmp.eq.s32.totalorder %v60, %v246
    %vm249 = vmand %vm85, %vm247
    %vm250 = vmand %vm86, %vm248
    %vm251 = vmand %vm87, %vm247
    %vm252 = vmand %vm88, %vm248
    %v253 = vsel %vm249, 1.0, %v241
    %v254 = vsel %vm250, 1.0, %v242
    %v255 = vsel %vm251, 1.0, %v243
    %v256 = vsel %vm252, 1.0, %v244
    %s257 = sld [smem:[#allocation2 + $0x85]]
    %v258 = vstv %s257
    %vm259 = vcmp.eq.s32.totalorder %v59, %v258
    %vm260 = vcmp.eq.s32.totalorder %v60, %v258
    %vm261 = vmand %vm89, %vm259
    %vm262 = vmand %vm90, %vm260
    %vm263 = vmand %vm91, %vm259
    %vm264 = vmand %vm92, %vm260
    %v265 = vsel %vm261, 1.0, %v253
    %v266 = vsel %vm262, 1.0, %v254
    %v267 = vsel %vm263, 1.0, %v255
    %v268 = vsel %vm264, 1.0, %v256
    %s269 = sld [smem:[#allocation2 + $0x86]]
    %v270 = vstv %s269
    %vm271 = vcmp.eq.s32.totalorder %v59, %v270
    %vm272 = vcmp.eq.s32.totalorder %v60, %v270
    %vm273 = vmand %vm93, %vm271
    %vm274 = vmand %vm94, %vm272
    %vm275 = vmand %vm95, %vm271
    %vm276 = vmand %vm96, %vm272
    %v277 = vsel %vm273, 1.0, %v265
    %v278 = vsel %vm274, 1.0, %v266
    %v279 = vsel %vm275, 1.0, %v267
    %v280 = vsel %vm276, 1.0, %v268
    %s281 = sld [smem:[#allocation2 + $0x87]]
    %v282 = vstv %s281
    %vm283 = vcmp.eq.s32.totalorder %v59, %v282
    %vm284 = vcmp.eq.s32.totalorder %v60, %v282
    %vm285 = vmand %vm97, %vm283
    %vm286 = vmand %vm98, %vm284
    %vm287 = vmand %vm99, %vm283
    %vm288 = vmand %vm100, %vm284
    %v289 = vsel %vm285, 1.0, %v277
    %v290 = vsel %vm286, 1.0, %v278
    %v291 = vsel %vm287, 1.0, %v279
    %v292 = vsel %vm288, 1.0, %v280
    %v293 = vpack.c.bf16 %v195, %v193
    %v294 = vpack.c.bf16 %v196, %v194
    %v295 = vpack.c.bf16 %v291, %v289
    %v296 = vpack.c.bf16 %v292, %v290
    %v297 = vld [vmem:[%s1] sm:$0xf]
    %v298 = vld [vmem:[%s1 + $0x4] sm:$0xf]
    %v299 = vld [vmem:[%s1 + $0x8] sm:$0xf]
    %v300 = vld [vmem:[%s1 + $0xc] sm:$0xf]
    %v301 = vld [vmem:[%s1 + $0x10] sm:$0xf]
    %v302 = vld [vmem:[%s1 + $0x14] sm:$0xf]
    %v303 = vld [vmem:[%s1 + $0x18] sm:$0xf]
    %v304 = vld [vmem:[%s1 + $0x1c] sm:$0xf]
    %v305 = vld [vmem:[%s1 + $0x20] sm:$0xf]
    %v306 = vld [vmem:[%s1 + $0x24] sm:$0xf]
    %v307 = vld [vmem:[%s1 + $0x28] sm:$0xf]
    %v308 = vld [vmem:[%s1 + $0x2c] sm:$0xf]
    %v309 = vld [vmem:[%s1 + $0x30] sm:$0xf]
    %v310 = vld [vmem:[%s1 + $0x34] sm:$0xf]
    %v311 = vld [vmem:[%s1 + $0x38] sm:$0xf]
    %v312 = vld [vmem:[%s1 + $0x3c] sm:$0xf]
    %v313 = vld [vmem:[%s1 + $0x40] sm:$0xf]
    %v314 = vld [vmem:[%s1 + $0x44] sm:$0xf]
    %v315 = vld [vmem:[%s1 + $0x48] sm:$0xf]
    %v316 = vld [vmem:[%s1 + $0x4c] sm:$0xf]
    %v317 = vld [vmem:[%s1 + $0x50] sm:$0xf]
    %v318 = vld [vmem:[%s1 + $0x54] sm:$0xf]
    %v319 = vld [vmem:[%s1 + $0x58] sm:$0xf]
    %v320 = vld [vmem:[%s1 + $0x5c] sm:$0xf]
    %v321 = vld [vmem:[%s1 + $0x60] sm:$0xf]
    %v322 = vld [vmem:[%s1 + $0x64] sm:$0xf]
    %v323 = vld [vmem:[%s1 + $0x68] sm:$0xf]
    %v324 = vld [vmem:[%s1 + $0x6c] sm:$0xf]
    %v325 = vld [vmem:[%s1 + $0x70] sm:$0xf]
    %v326 = vld [vmem:[%s1 + $0x74] sm:$0xf]
    %v327 = vld [vmem:[%s1 + $0x78] sm:$0xf]
    %v328 = vld [vmem:[%s1 + $0x7c] sm:$0xf]
    %v329 = vld [vmem:[%s2] sm:$0x3]
    %v330 = vlaneseq
    %v331 = vshrl.u32 %v330, 7
    %v332 = vsub.s32 0, %v331
    %v333 = vrot.slane %v329, %v332
    %v366 = vunpack.c.l.b16 %v297
    %v367 = vunpack.c.l.b16 %v298
    %v368 = vunpack.c.l.b16 %v299
    %v369 = vunpack.c.l.b16 %v300
    %v370 = vunpack.c.l.b16 %v301
    %v371 = vunpack.c.l.b16 %v302
    %v372 = vunpack.c.l.b16 %v303
    %v373 = vunpack.c.l.b16 %v304
    %v374 = vunpack.c.l.b16 %v305
    %v375 = vunpack.c.l.b16 %v306
    %v376 = vunpack.c.l.b16 %v307
    %v377 = vunpack.c.l.b16 %v308
    %v378 = vunpack.c.l.b16 %v309
    %v379 = vunpack.c.l.b16 %v310
    %v380 = vunpack.c.l.b16 %v311
    %v381 = vunpack.c.l.b16 %v312
    %v382 = vunpack.c.l.b16 %v313
    %v383 = vunpack.c.l.b16 %v314
    %v384 = vunpack.c.l.b16 %v315
    %v385 = vunpack.c.l.b16 %v316
    %v386 = vunpack.c.l.b16 %v317
    %v387 = vunpack.c.l.b16 %v318
    %v388 = vunpack.c.l.b16 %v319
    %v389 = vunpack.c.l.b16 %v320
    %v390 = vunpack.c.l.b16 %v321
    %v391 = vunpack.c.l.b16 %v322
    %v392 = vunpack.c.l.b16 %v323
    %v393 = vunpack.c.l.b16 %v324
    %v394 = vunpack.c.l.b16 %v325
    %v395 = vunpack.c.l.b16 %v326
    %v396 = vunpack.c.l.b16 %v327
    %v397 = vunpack.c.l.b16 %v328
    %v398 = vpack.c.b16 %v367, %v366
    %v399 = vpack.c.b16 %v369, %v368
    %v400 = vpack.c.b16 %v371, %v370
    %v401 = vpack.c.b16 %v373, %v372
    %v402 = vpack.c.b16 %v375, %v374
    %v403 = vpack.c.b16 %v377, %v376
    %v404 = vpack.c.b16 %v379, %v378
    %v405 = vpack.c.b16 %v381, %v380
    %v406 = vpack.c.b16 %v383, %v382
    %v407 = vpack.c.b16 %v385, %v384
    %v408 = vpack.c.b16 %v387, %v386
    %v409 = vpack.c.b16 %v389, %v388
    %v410 = vpack.c.b16 %v391, %v390
    %v411 = vpack.c.b16 %v393, %v392
    %v412 = vpack.c.b16 %v395, %v394
    %v413 = vpack.c.b16 %v397, %v396
    %430 = vmatprep.subr.bf16.mxu0 0
    %431 = vmatpush1.bf16.msra.mxu0 %v405
    %432 = vmatprep.subr.bf16.mxu0 0
    %433 = vmatpush1.bf16.msra.mxu0 %v404
    %434 = vmatprep.subr.bf16.mxu0 0
    %435 = vmatpush1.bf16.msra.mxu0 %v403
    %436 = vmatprep.subr.bf16.mxu0 0
    %437 = vmatpush1.bf16.msra.mxu0 %v402
    %438 = vmatprep.subr.bf16.mxu0 0
    %439 = vmatpush1.bf16.msra.mxu0 %v401
    %440 = vmatprep.subr.bf16.mxu0 0
    %441 = vmatpush1.bf16.msra.mxu0 %v400
    %442 = vmatprep.subr.bf16.mxu0 0
    %443 = vmatpush1.bf16.msra.mxu0 %v399
    %444 = vmatprep.subr.bf16.mxu0 0
    %445 = vmatpush1.bf16.msra.mxu0 %v398
    %446 = vmatprep.subr.bf16.mxu0 0
    %447 = vmatpush2.bf16.msra.mxu0 %v413
    %448 = vmatprep.subr.bf16.mxu0 0
    %449 = vmatpush2.bf16.msra.mxu0 %v412
    %450 = vmatprep.subr.bf16.mxu0 0
    %451 = vmatpush2.bf16.msra.mxu0 %v411
    %452 = vmatprep.subr.bf16.mxu0 0
    %453 = vmatpush2.bf16.msra.mxu0 %v410
    %454 = vmatprep.subr.bf16.mxu0 0
    %455 = vmatpush2.bf16.msra.mxu0 %v409
    %456 = vmatprep.subr.bf16.mxu0 0
    %457 = vmatpush2.bf16.msra.mxu0 %v408
    %458 = vmatprep.subr.bf16.mxu0 0
    %459 = vmatpush2.bf16.msra.mxu0 %v407
    %460 = vmatprep.subr.bf16.mxu0 0
    %461 = vmatpush2.bf16.msra.mxu0 %v406
    %462 = vmatprep.mubr.bf16.mxu0 %v294
    %463 = vmatmul.mubr.bf16.gmra.mxu0 %v293
    %v464 = vpop.f32.mrf.mxu0
    %v465 = vadd.f32 %v333, %v464
    %v466 = vpop.f32.mrf.mxu0
    %v467 = vpop.f32.mrf.mxu0
    %v468 = vadd.f32 %v333, %v467
    %v469 = vpop.f32.mrf.mxu0
    %470 = vmatprep.mubr.bf16.mxu0 %v296
    %471 = vmatmul.mubr.bf16.gmra.mxu0 %v295
    %v472 = vpop.f32.mrf.mxu0
    %v473 = vadd.f32 %v333, %v472
    %v474 = vpop.f32.mrf.mxu0
    %v475 = vpop.f32.mrf.mxu0
    %v476 = vadd.f32 %v333, %v475
    %v477 = vpop.f32.mrf.mxu0
    %478 = vdwg.mxu0
    %v479 = vmax.f32 %v465, 0.0
    %v480 = vmax.f32 %v468, 0.0
    %v481 = vmax.f32 %v473, 0.0
    %v482 = vmax.f32 %v476, 0.0
    %vm483 = vcmp.ge.s32.totalorder %v33, 8
    %v484 = vsel %vm483, 8, 9
    %vm485 = vcmp.ge.s32.totalorder %v33, 16
    %v486 = vsel %vm485, 9, %v484
    %vm487 = vcmp.ge.s32.totalorder %v33, 24
    %v488 = vsel %vm487, 8, %v486
    %vm489 = vcmp.lt.s32.totalorder %v30, %v488
    %vm490 = vcmp.lt.s32.totalorder %v31, %v488
    %v491 = vsel %vm489, %v479, 0.0
    %v492 = vsel %vm490, %v480, 0.0
    %v493 = vsel %vm489, %v481, 0.0
    %v494 = vsel %vm490, %v482, 0.0
    %vm495 = vcmask 261120
    %v496 = vsel %vm495, %v491, -inf
    %v497 = vsel %vm495, %v492, -inf
    %v498 = vmax.f32 %v496, %v497
    %v499 = vrot.slane %v498, 4
    %v500 = vmax.f32 %v498, %v499
    %v501 = vrot.slane %v500, 2
    %v502 = vmax.f32 %v500, %v501
    %v503 = vrot.slane %v502, 1
    %v504 = vmax.f32 %v502, %v503
    %v505 = vsel %vm495, %v493, -inf
    %v506 = vsel %vm495, %v494, -inf
    %v507 = vmax.f32 %v505, %v506
    %v508 = vrot.slane %v507, 4
    %v509 = vmax.f32 %v507, %v508
    %v510 = vrot.slane %v509, 2
    %v511 = vmax.f32 %v509, %v510
    %v512 = vrot.slane %v511, 1
    %v513 = vmax.f32 %v511, %v512
    %v514 = vpack.c.bf16 %v504, %v504
    %v515 = vpack.c.bf16 %v513, %v513
    %v516 = vld [vmem:[%s1 + $0x80] sm:$0xf]
    %v517 = vld [vmem:[%s1 + $0x84] sm:$0xf]
    %v518 = vld [vmem:[%s1 + $0x88] sm:$0xf]
    %v519 = vld [vmem:[%s1 + $0x8c] sm:$0xf]
    %v522 = vunpack.c.l.b16 %v514
    %v523 = vunpack.c.l.b16 %v515
    %vm524 = vcmask 1041409
    %v525 = vsel %vm524, %v523, %v522
    %v526 = vpack.c.b16 %v525, %v525
    %v531 = vunpack.c.l.b16 %v516
    %v532 = vunpack.c.l.b16 %v517
    %v533 = vunpack.c.l.b16 %v518
    %v534 = vunpack.c.l.b16 %v519
    %v535 = vpack.c.b16 %v532, %v531
    %v536 = vpack.c.b16 %v534, %v533
    %v540 = vsel %vm495, %v526, 0
    %542 = vmatprep.subr.bf16.mxu0 0
    %543 = vmatpush1.bf16.msra.mxu0 0
    %544 = vmatprep.subr.bf16.mxu0 0
    %545 = vmatpush1.bf16.msra.mxu0 0
    %546 = vmatprep.subr.bf16.mxu0 0
    %547 = vmatpush1.bf16.msra.mxu0 0
    %548 = vmatprep.subr.bf16.mxu0 0
    %549 = vmatpush1.bf16.msra.mxu0 0
    %550 = vmatprep.subr.bf16.mxu0 0
    %551 = vmatpush1.bf16.msra.mxu0 0
    %552 = vmatprep.subr.bf16.mxu0 0
    %553 = vmatpush1.bf16.msra.mxu0 0
    %554 = vmatprep.subr.bf16.mxu0 0
    %555 = vmatpush1.bf16.msra.mxu0 %v536
    %556 = vmatprep.subr.bf16.mxu0 0
    %557 = vmatpush1.bf16.msra.mxu0 %v535
    %558 = vmatprep.subr.bf16.mxu0 0
    %559 = vmatpush2.bf16.msra.mxu0 0
    %560 = vmatprep.subr.bf16.mxu0 0
    %561 = vmatpush2.bf16.msra.mxu0 0
    %562 = vmatprep.subr.bf16.mxu0 0
    %563 = vmatpush2.bf16.msra.mxu0 0
    %564 = vmatprep.subr.bf16.mxu0 0
    %565 = vmatpush2.bf16.msra.mxu0 0
    %566 = vmatprep.subr.bf16.mxu0 0
    %567 = vmatpush2.bf16.msra.mxu0 0
    %568 = vmatprep.subr.bf16.mxu0 0
    %569 = vmatpush2.bf16.msra.mxu0 0
    %570 = vmatprep.subr.bf16.mxu0 0
    %571 = vmatpush2.bf16.msra.mxu0 0
    %572 = vmatprep.subr.bf16.mxu0 0
    %573 = vmatpush2.bf16.msra.mxu0 0
    %574 = vmatprep.mubr.bf16.mxu0 0
    %575 = vmatmul.mubr.bf16.gmra.mxu0 %v540
    %v576 = vpop.f32.mrf.mxu0
    %v577 = vadd.f32 0.0, %v576
    %v578 = vpop.f32.mrf.mxu0
    %v579 = vpop.f32.mrf.mxu0
    %v580 = vpop.f32.mrf.mxu0
    %581 = vdwg.mxu0
    %v582 = vlaneseq
    %v583 = vshrl.u32 %v582, 7
    %v584 = vsub.s32 1, %v583
    %v585 = vrot.slane %v329, %v584
    %v586 = vadd.f32 %v577, %v585
    %vm587 = vcmask 33792
    %588 = vst.msk [vmem:[#allocation5] sm:$0x3] %vm587, %v586
    // Predicated region
    $region18: #{my_cnn_forward.1} parent=1 // pred_check
      _
    $region19: #{my_cnn_forward.1} parent=1 // pred_check_branch
      %590 = sbr.rel (0) target = $region21
    $region20: #{my_cnn_forward.1} parent=1 // pred_region
      %s592 = ssub.s32 32, 32
      %593 = vsyncadd [#allocation3], %s592
      %s595 = sshll.u32 [#allocation5], 4
      %s596 = int_to_ptr.vmem [resolvable:$true] %s595
      %598 = dma.vmem_to_hbm [thread:$0]  %s596, 32, %s3, [#allocation3]
    $region21: #{my_cnn_forward.1} parent=1 // pred_fallthru
      _
    // Predicated region
    $region22: #{my_cnn_forward.1} parent=1 // pred_check
      _
    $region23: #{my_cnn_forward.1} parent=1 // pred_check_branch
      %600 = sbr.rel (0) target = $region25
    $region24: #{my_cnn_forward.1} parent=1 // pred_region
      %601 = dma.done [#allocation3], 32
    $region25: #{my_cnn_forward.1} parent=1 // pred_fallthru
      _
    %602 = vsyncpa [#allocation3], 1
    %603 = vsyncpa [#allocation4], 1

</llo_original>
